<compile_context>
chip_gen: v5e
topology: v5e:2x2
jax: 0.10.0
libtpu: 0.0.40
codegen_flags: <defaults>
</compile_context>

<pallas_src>
import jax
import jax.numpy as jnp
from jax.experimental import pallas as pl
from jax.experimental.pallas import tpu as pltpu

NEG_SLOPE = 0.01  # torch.nn.LeakyReLU default


def _leaky_relu(h):
    # Keep the elementwise path in f32 (v5e VPU/EUP have no bf16 support).
    return jnp.where(h > 0, h, NEG_SLOPE * h)


def mlp_kernel(x_ref,
               w1_ref, b1_ref,
               w2_ref, b2_ref,
               w3_ref, b3_ref,
               w4_ref, b4_ref,
               w5_ref, b5_ref,
               o_ref):
    def lin(h, w_ref, b_ref):
        # (out, in) @ (in, batch_tile) -> (out, batch_tile); bias (out, 1)
        # broadcasts along the lane (batch) axis.
        return jnp.dot(w_ref[...], h, preferred_element_type=jnp.float32) + b_ref[...]

    h = x_ref[...]                                   # (D_in, batch_tile), f32
    h = _leaky_relu(lin(h, w1_ref, b1_ref))
    h = _leaky_relu(lin(h, w2_ref, b2_ref))
    h = _leaky_relu(lin(h, w3_ref, b3_ref))
    h = _leaky_relu(lin(h, w4_ref, b4_ref))
    o_ref[...] = lin(h, w5_ref, b5_ref).astype(o_ref.dtype)   # final: no activation


def mlp_forward(x, params, *, batch_tile=512):
    """x: (B, D_in).  params: list of (W, b) with W (out, in) and b (out, 1).

    Returns (B, D_out), matching the PyTorch module's forward."""
    B, D_in = x.shape
    D_out = params[-1][0].shape[0]

    # Lane-dense batch tiles: multiples of 128 lanes.  Ragged batches are
    # padded (cheap XLA pad of the tiny (D_in, B) slab) and sliced back.
    batch_tile = max(128, (batch_tile // 128) * 128)
    n_tiles = pl.cdiv(B, batch_tile)
    B_pad = n_tiles * batch_tile

    xt = jnp.asarray(x, jnp.float32).T               # (D_in, B): batch on lanes
    if B_pad != B:
        xt = jnp.pad(xt, ((0, 0), (0, B_pad - B)))

    in_specs = [pl.BlockSpec((D_in, batch_tile), lambda i: (0, i))]
    flat_params = []
    for (w, b) in params:
        # Grid-invariant full-array blocks; the whole parameter set is a few KiB
        # so it stays resident in VMEM for every (few) grid step(s).
        in_specs.append(pl.BlockSpec(w.shape, lambda i: (0, 0)))
        in_specs.append(pl.BlockSpec(b.shape, lambda i: (0, 0)))
        flat_params.extend([w, b])

    out_t = pl.pallas_call(
        mlp_kernel,
        out_shape=jax.ShapeDtypeStruct((D_out, B_pad), jnp.float32),
        grid=(n_tiles,),
        in_specs=in_specs,
        out_specs=pl.BlockSpec((D_out, batch_tile), lambda i: (0, i)),
        compiler_params=pltpu.CompilerParams(
            dimension_semantics=("parallel",),       # batch tiles shard across TCs
        ),
    )(xt, *flat_params)

    return out_t[:, :B].T                            # back to (B, D_out)


def init_params(key, dims):
    """PyTorch-style Linear init: U(-1/sqrt(fan_in), 1/sqrt(fan_in)).

    Weights kept in native (out, in) layout, biases as (out, 1) columns."""
    params = []
    for d_in, d_out in zip(dims[:-1], dims[1:]):
        key, kw, kb = jax.random.split(key, 3)
        bound = 1.0 / jnp.sqrt(jnp.float32(d_in))
        w = jax.random.uniform(kw, (d_out, d_in), jnp.float32, -bound, bound)
        b = jax.random.uniform(kb, (d_out, 1), jnp.float32, -bound, bound)
        params.append((w, b))
    return params


def reference_forward(x, params):
    h = x
    for i, (w, b) in enumerate(params):
        h = h @ w.T + b.T
        if i < len(params) - 1:
            h = jnp.where(h > 0, h, NEG_SLOPE * h)
    return h


if __name__ == "__main__":
    # California-housing-like MLP: D_in=8 features, hidden 32/64/32/16, D_out=1.
    D_in, H1, H2, H3, H4, D_out = 8, 32, 64, 32, 16, 1

    key = jax.random.PRNGKey(0)
    key, kx1, kx2 = jax.random.split(key, 3)
    params = init_params(key, (D_in, H1, H2, H3, H4, D_out))

    # Case 1: batch divisible by the tile -> 2 parallel grid steps (v7x: both TCs).
    B1 = 256
    x1 = jax.random.normal(kx1, (B1, D_in), jnp.float32)
    out1 = jax.block_until_ready(mlp_forward(x1, params, batch_tile=128))
    ref1 = reference_forward(x1, params)
    assert out1.shape == (B1, D_out)
    assert jnp.allclose(out1, ref1, atol=1e-4, rtol=1e-4), "mismatch vs reference (B=256)"

    # Case 2: ragged batch -> padded to one 128-lane tile inside the wrapper.
    B2 = 100
    x2 = jax.random.normal(kx2, (B2, D_in), jnp.float32)
    out2 = jax.block_until_ready(mlp_forward(x2, params, batch_tile=128))
    ref2 = reference_forward(x2, params)
    assert out2.shape == (B2, D_out)
    assert jnp.allclose(out2, ref2, atol=1e-4, rtol=1e-4), "mismatch vs reference (B=100)"

    print("KERNEL_OK")
</pallas_src>

<mosaic_0001>
module attributes {stable_mosaic.version = 11 : i64} {
  func.func @mlp_kernel(%arg0: i32, %arg1: memref<8x128xf32, #tpu.memory_space<vmem>>, %arg2: memref<32x8xf32, #tpu.memory_space<vmem>>, %arg3: memref<32x1xf32, #tpu.memory_space<vmem>>, %arg4: memref<64x32xf32, #tpu.memory_space<vmem>>, %arg5: memref<64x1xf32, #tpu.memory_space<vmem>>, %arg6: memref<32x64xf32, #tpu.memory_space<vmem>>, %arg7: memref<32x1xf32, #tpu.memory_space<vmem>>, %arg8: memref<16x32xf32, #tpu.memory_space<vmem>>, %arg9: memref<16x1xf32, #tpu.memory_space<vmem>>, %arg10: memref<1x16xf32, #tpu.memory_space<vmem>>, %arg11: memref<1x1xf32, #tpu.memory_space<vmem>>, %arg12: memref<1x128xf32, #tpu.memory_space<vmem>>) attributes {dimension_semantics = [#tpu.dimension_semantics<parallel>], iteration_bounds = array<i64: 2>, scalar_prefetch = 0 : i64, scratch_operands = 0 : i64, tpu.core_type = #tpu.core_type<tc>, window_params = [{transform_indices = @transform_0, window_bounds = array<i64: 8, 128>}, {pipeline_mode = #tpu.pipeline_mode<synchronous>, transform_indices = @transform_1, window_bounds = array<i64: 32, 8>}, {pipeline_mode = #tpu.pipeline_mode<synchronous>, transform_indices = @transform_2, window_bounds = array<i64: 32, 1>}, {pipeline_mode = #tpu.pipeline_mode<synchronous>, transform_indices = @transform_3, window_bounds = array<i64: 64, 32>}, {pipeline_mode = #tpu.pipeline_mode<synchronous>, transform_indices = @transform_4, window_bounds = array<i64: 64, 1>}, {pipeline_mode = #tpu.pipeline_mode<synchronous>, transform_indices = @transform_5, window_bounds = array<i64: 32, 64>}, {pipeline_mode = #tpu.pipeline_mode<synchronous>, transform_indices = @transform_6, window_bounds = array<i64: 32, 1>}, {pipeline_mode = #tpu.pipeline_mode<synchronous>, transform_indices = @transform_7, window_bounds = array<i64: 16, 32>}, {pipeline_mode = #tpu.pipeline_mode<synchronous>, transform_indices = @transform_8, window_bounds = array<i64: 16, 1>}, {pipeline_mode = #tpu.pipeline_mode<synchronous>, transform_indices = @transform_9, window_bounds = array<i64: 1, 16>}, {pipeline_mode = #tpu.pipeline_mode<synchronous>, transform_indices = @transform_10, window_bounds = array<i64: 1, 1>}, {transform_indices = @transform_11, window_bounds = array<i64: 1, 128>}]} {
    %c0 = arith.constant 0 : index
    %c0_0 = arith.constant 0 : index
    %0 = vector.load %arg1[%c0, %c0_0] : memref<8x128xf32, #tpu.memory_space<vmem>>, vector<8x128xf32>
    %c0_1 = arith.constant 0 : index
    %c0_2 = arith.constant 0 : index
    %1 = vector.load %arg2[%c0_1, %c0_2] : memref<32x8xf32, #tpu.memory_space<vmem>>, vector<32x8xf32>
    %cst = arith.constant dense<0.000000e+00> : vector<32x128xf32>
    %2 = tpu.matmul %1, %0, %cst {dimension_numbers = #tpu.dot_dimension_numbers<[1], [0], [0], [1], [0, 0, 1, 1], [], []>} : vector<32x8xf32>, vector<8x128xf32>, vector<32x128xf32> -> vector<32x128xf32>
    %c0_3 = arith.constant 0 : index
    %c0_4 = arith.constant 0 : index
    %3 = vector.load %arg3[%c0_3, %c0_4] : memref<32x1xf32, #tpu.memory_space<vmem>>, vector<32x1xf32>
    %4 = vector.broadcast %3 : vector<32x1xf32> to vector<32x128xf32>
    %5 = arith.addf %2, %4 : vector<32x128xf32>
    %cst_5 = arith.constant 0.000000e+00 : f32
    %6 = vector.broadcast %cst_5 : f32 to vector<32x128xf32>
    %7 = arith.cmpf ogt, %5, %6 : vector<32x128xf32>
    %cst_6 = arith.constant 0.00999999977 : f32
    %8 = vector.broadcast %cst_6 : f32 to vector<32x128xf32>
    %9 = arith.mulf %8, %5 : vector<32x128xf32>
    %10 = arith.select %7, %5, %9 : vector<32x128xi1>, vector<32x128xf32>
    %c0_7 = arith.constant 0 : index
    %c0_8 = arith.constant 0 : index
    %11 = vector.load %arg4[%c0_7, %c0_8] : memref<64x32xf32, #tpu.memory_space<vmem>>, vector<64x32xf32>
    %cst_9 = arith.constant dense<0.000000e+00> : vector<64x128xf32>
    %12 = tpu.matmul %11, %10, %cst_9 {dimension_numbers = #tpu.dot_dimension_numbers<[1], [0], [0], [1], [0, 0, 1, 1], [], []>} : vector<64x32xf32>, vector<32x128xf32>, vector<64x128xf32> -> vector<64x128xf32>
    %c0_10 = arith.constant 0 : index
    %c0_11 = arith.constant 0 : index
    %13 = vector.load %arg5[%c0_10, %c0_11] : memref<64x1xf32, #tpu.memory_space<vmem>>, vector<64x1xf32>
    %14 = vector.broadcast %13 : vector<64x1xf32> to vector<64x128xf32>
    %15 = arith.addf %12, %14 : vector<64x128xf32>
    %cst_12 = arith.constant 0.000000e+00 : f32
    %16 = vector.broadcast %cst_12 : f32 to vector<64x128xf32>
    %17 = arith.cmpf ogt, %15, %16 : vector<64x128xf32>
    %cst_13 = arith.constant 0.00999999977 : f32
    %18 = vector.broadcast %cst_13 : f32 to vector<64x128xf32>
    %19 = arith.mulf %18, %15 : vector<64x128xf32>
    %20 = arith.select %17, %15, %19 : vector<64x128xi1>, vector<64x128xf32>
    %c0_14 = arith.constant 0 : index
    %c0_15 = arith.constant 0 : index
    %21 = vector.load %arg6[%c0_14, %c0_15] : memref<32x64xf32, #tpu.memory_space<vmem>>, vector<32x64xf32>
    %cst_16 = arith.constant dense<0.000000e+00> : vector<32x128xf32>
    %22 = tpu.matmul %21, %20, %cst_16 {dimension_numbers = #tpu.dot_dimension_numbers<[1], [0], [0], [1], [0, 0, 1, 1], [], []>} : vector<32x64xf32>, vector<64x128xf32>, vector<32x128xf32> -> vector<32x128xf32>
    %c0_17 = arith.constant 0 : index
    %c0_18 = arith.constant 0 : index
    %23 = vector.load %arg7[%c0_17, %c0_18] : memref<32x1xf32, #tpu.memory_space<vmem>>, vector<32x1xf32>
    %24 = vector.broadcast %23 : vector<32x1xf32> to vector<32x128xf32>
    %25 = arith.addf %22, %24 : vector<32x128xf32>
    %cst_19 = arith.constant 0.000000e+00 : f32
    %26 = vector.broadcast %cst_19 : f32 to vector<32x128xf32>
    %27 = arith.cmpf ogt, %25, %26 : vector<32x128xf32>
    %cst_20 = arith.constant 0.00999999977 : f32
    %28 = vector.broadcast %cst_20 : f32 to vector<32x128xf32>
    %29 = arith.mulf %28, %25 : vector<32x128xf32>
    %30 = arith.select %27, %25, %29 : vector<32x128xi1>, vector<32x128xf32>
    %c0_21 = arith.constant 0 : index
    %c0_22 = arith.constant 0 : index
    %31 = vector.load %arg8[%c0_21, %c0_22] : memref<16x32xf32, #tpu.memory_space<vmem>>, vector<16x32xf32>
    %cst_23 = arith.constant dense<0.000000e+00> : vector<16x128xf32>
    %32 = tpu.matmul %31, %30, %cst_23 {dimension_numbers = #tpu.dot_dimension_numbers<[1], [0], [0], [1], [0, 0, 1, 1], [], []>} : vector<16x32xf32>, vector<32x128xf32>, vector<16x128xf32> -> vector<16x128xf32>
    %c0_24 = arith.constant 0 : index
    %c0_25 = arith.constant 0 : index
    %33 = vector.load %arg9[%c0_24, %c0_25] : memref<16x1xf32, #tpu.memory_space<vmem>>, vector<16x1xf32>
    %34 = vector.broadcast %33 : vector<16x1xf32> to vector<16x128xf32>
    %35 = arith.addf %32, %34 : vector<16x128xf32>
    %cst_26 = arith.constant 0.000000e+00 : f32
    %36 = vector.broadcast %cst_26 : f32 to vector<16x128xf32>
    %37 = arith.cmpf ogt, %35, %36 : vector<16x128xf32>
    %cst_27 = arith.constant 0.00999999977 : f32
    %38 = vector.broadcast %cst_27 : f32 to vector<16x128xf32>
    %39 = arith.mulf %38, %35 : vector<16x128xf32>
    %40 = arith.select %37, %35, %39 : vector<16x128xi1>, vector<16x128xf32>
    %c0_28 = arith.constant 0 : index
    %c0_29 = arith.constant 0 : index
    %41 = vector.load %arg10[%c0_28, %c0_29] : memref<1x16xf32, #tpu.memory_space<vmem>>, vector<1x16xf32>
    %cst_30 = arith.constant dense<0.000000e+00> : vector<1x128xf32>
    %42 = tpu.matmul %41, %40, %cst_30 {dimension_numbers = #tpu.dot_dimension_numbers<[1], [0], [0], [1], [0, 0, 1, 1], [], []>} : vector<1x16xf32>, vector<16x128xf32>, vector<1x128xf32> -> vector<1x128xf32>
    %c0_31 = arith.constant 0 : index
    %c0_32 = arith.constant 0 : index
    %43 = vector.load %arg11[%c0_31, %c0_32] : memref<1x1xf32, #tpu.memory_space<vmem>>, vector<1x1xf32>
    %44 = vector.broadcast %43 : vector<1x1xf32> to vector<1x128xf32>
    %45 = arith.addf %42, %44 : vector<1x128xf32>
    %c0_33 = arith.constant 0 : index
    %c0_34 = arith.constant 0 : index
    %46 = vector.load %arg12[%c0_33, %c0_34] : memref<1x128xf32, #tpu.memory_space<vmem>>, vector<1x128xf32>
    tpu.vector_store %arg12[%c0_33, %c0_34], %45 {strides = array<i32>} : memref<1x128xf32, #tpu.memory_space<vmem>>, vector<1x128xf32>,
    return
  }
  func.func @transform_0(%arg0: i32) -> (i32, i32) {
    %c0_i32 = arith.constant 0 : i32
    %c0_i32_0 = arith.constant 0 : i32
    return %c0_i32, %arg0 : i32, i32
  }
  func.func @transform_1(%arg0: i32) -> (i32, i32) {
    %c0_i32 = arith.constant 0 : i32
    %c0_i32_0 = arith.constant 0 : i32
    %c0_i32_1 = arith.constant 0 : i32
    return %c0_i32, %c0_i32_0 : i32, i32
  }
  func.func @transform_2(%arg0: i32) -> (i32, i32) {
    %c0_i32 = arith.constant 0 : i32
    %c0_i32_0 = arith.constant 0 : i32
    %c0_i32_1 = arith.constant 0 : i32
    return %c0_i32, %c0_i32_0 : i32, i32
  }
  func.func @transform_3(%arg0: i32) -> (i32, i32) {
    %c0_i32 = arith.constant 0 : i32
    %c0_i32_0 = arith.constant 0 : i32
    %c0_i32_1 = arith.constant 0 : i32
    return %c0_i32, %c0_i32_0 : i32, i32
  }
  func.func @transform_4(%arg0: i32) -> (i32, i32) {
    %c0_i32 = arith.constant 0 : i32
    %c0_i32_0 = arith.constant 0 : i32
    %c0_i32_1 = arith.constant 0 : i32
    return %c0_i32, %c0_i32_0 : i32, i32
  }
  func.func @transform_5(%arg0: i32) -> (i32, i32) {
    %c0_i32 = arith.constant 0 : i32
    %c0_i32_0 = arith.constant 0 : i32
    %c0_i32_1 = arith.constant 0 : i32
    return %c0_i32, %c0_i32_0 : i32, i32
  }
  func.func @transform_6(%arg0: i32) -> (i32, i32) {
    %c0_i32 = arith.constant 0 : i32
    %c0_i32_0 = arith.constant 0 : i32
    %c0_i32_1 = arith.constant 0 : i32
    return %c0_i32, %c0_i32_0 : i32, i32
  }
  func.func @transform_7(%arg0: i32) -> (i32, i32) {
    %c0_i32 = arith.constant 0 : i32
    %c0_i32_0 = arith.constant 0 : i32
    %c0_i32_1 = arith.constant 0 : i32
    return %c0_i32, %c0_i32_0 : i32, i32
  }
  func.func @transform_8(%arg0: i32) -> (i32, i32) {
    %c0_i32 = arith.constant 0 : i32
    %c0_i32_0 = arith.constant 0 : i32
    %c0_i32_1 = arith.constant 0 : i32
    return %c0_i32, %c0_i32_0 : i32, i32
  }
  func.func @transform_9(%arg0: i32) -> (i32, i32) {
    %c0_i32 = arith.constant 0 : i32
    %c0_i32_0 = arith.constant 0 : i32
    %c0_i32_1 = arith.constant 0 : i32
    return %c0_i32, %c0_i32_0 : i32, i32
  }
  func.func @transform_10(%arg0: i32) -> (i32, i32) {
    %c0_i32 = arith.constant 0 : i32
    %c0_i32_0 = arith.constant 0 : i32
    %c0_i32_1 = arith.constant 0 : i32
    return %c0_i32, %c0_i32_0 : i32, i32
  }
  func.func @transform_11(%arg0: i32) -> (i32, i32) {
    %c0_i32 = arith.constant 0 : i32
    %c0_i32_0 = arith.constant 0 : i32
    return %c0_i32, %arg0 : i32, i32
  }
}

</mosaic_0001>

<llo_original>
// kernel: tpu_custom_call.1
$region0: #{tpu_custom_call.1}
  #allocation0 [shape = 'u32[]', space=smem, size = 0x4, offset = 0x4, fixed_abs, tag = 'smem constant byte address 0x4 - core index']
  #allocation1 [shape = 'u32[72,128]{1,0:T(1,128)}', space=vmem, size = 0x9000, scoped, tag = 'internal scratch']
  #allocation2 [shape = 'f32[1,1]{1,0:T(1,128)S(1)}', space=vmem, size = 0x200, scoped, tag = 'scoped memory for tpu_custom_call.1']
  %s0 = inlined_call_operand.vmem [shape: f32[8,256], index: 0, kind: input, shape index: {}]
  %s1 = inlined_call_operand.vmem [shape: f32[32,8], index: 1, kind: input, shape index: {}]
  %s2 = inlined_call_operand.vmem [shape: f32[32,1], index: 2, kind: input, shape index: {}]
  %s3 = inlined_call_operand.vmem [shape: f32[64,32], index: 3, kind: input, shape index: {}]
  %s4 = inlined_call_operand.vmem [shape: f32[64,1], index: 4, kind: input, shape index: {}]
  %s5 = inlined_call_operand.vmem [shape: f32[32,64], index: 5, kind: input, shape index: {}]
  %s6 = inlined_call_operand.vmem [shape: f32[32,1], index: 6, kind: input, shape index: {}]
  %s7 = inlined_call_operand.vmem [shape: f32[16,32], index: 7, kind: input, shape index: {}]
  %s8 = inlined_call_operand.vmem [shape: f32[16,1], index: 8, kind: input, shape index: {}]
  %s9 = inlined_call_operand.vmem [shape: f32[1,16], index: 9, kind: input, shape index: {}]
  %s10 = inlined_call_operand.<no memory space> [shape: f32[1,1], index: 10, kind: input, shape index: {}]
  %s11 = inlined_call_operand.hbm [shape: f32[1,256], index: 11, kind: output, shape index: {}]
  %s12 = sld [smem:[#allocation0]]
  $region77: #{tpu_custom_call.1} parent=0
    _
  %s14 = ssub.s32 1, %s12
  %s15 = scalar_select 0, %s14, %s12
  %v16 = vstv %s10
  %17 = vst [vmem:[#allocation2] sm:$0x1] %v16
  $region1: #{tpu_custom_call.1} parent=0
    #allocation3 [shape = 'u8[1024]{0}', space=vmem, size = 0x400, scoped, tag = 'output window, operand 0']
    #allocation4 [shape = 's32[2]{0}', space=sflag, size = 0x8, scoped, tag = 'scoped memory for tpu_custom_call.1']
    %18 = vsyncpa [#allocation4], 0
    %s19 = scalar_lea.sflag [#allocation4], 1
    %20 = vsyncpa %s19, 0
    loop: start=0, step=1, limit=4
    $region2: #{tpu_custom_call.1} parent=1 // loop_pre_header
      _
    $region3: #{tpu_custom_call.1} parent=1 // loop_header
      %s22 = sphi 0, %s26
      %p23 = scmp.ge.s32.totalorder %s22, 4
      %s32 = sphi 0, %s34
      %s35 = sphi 0, %s32
      %s36 = sphi 0, %s35
      %s52 = sphi 0, %s36
      %s56 = sphi 0, %s56
      %s58 = sphi 0, %s56
      %s59 = sphi 0, %s58
      %s73 = sphi 0, %s59
      %s77 = sphi 0, %s77
      %s79 = sphi 0, %s77
      %s80 = sphi 0, %s79
      %s94 = sphi 0, %s80
      %s98 = sphi 0, %s98
      %s100 = sphi 0, %s98
      %s101 = sphi 0, %s100
      %s115 = sphi 0, %s101
      %s119 = sphi 0, %s119
      %s121 = sphi 0, %s119
      %s122 = sphi 0, %s121
      %s136 = sphi 0, %s122
      %s140 = sphi 0, %s140
      %s142 = sphi 0, %s140
      %s143 = sphi 0, %s142
      %s157 = sphi 0, %s143
      %s161 = sphi 0, %s161
      %s163 = sphi 0, %s161
      %s164 = sphi 0, %s163
      %s178 = sphi 0, %s164
      %s182 = sphi 0, %s182
      %s184 = sphi 0, %s182
      %s185 = sphi 0, %s184
      %s199 = sphi 0, %s185
      %s203 = sphi 0, %s203
      %s205 = sphi 0, %s203
      %s206 = sphi 0, %s205
      %s220 = sphi 0, %s206
      %s224 = sphi 0, %s224
      %s226 = sphi 0, %s224
      %s227 = sphi 0, %s226
      %s241 = sphi 0, %s227
      %s245 = sphi 0, %s245
      %s247 = sphi 0, %s245
      %s248 = sphi 0, %s247
      %s262 = sphi 0, %s248
      %s268 = sphi 0, %s270
      %s271 = sphi 0, %s268
      %s272 = sphi 0, %s271
      %s288 = sphi 0, %s272
    $region4: #{tpu_custom_call.1} parent=1 // loop_header_branch
      %25 = sbr.rel (%p23) target = $region8
    $region5: #{tpu_custom_call.1} parent=1 // loop_body
      %s27 = ssub.s32 %s22, 1
      %s28 = ssub.s32 %s22, 2
      %s29 = sadd.s32 %s22, 1
      %s30 = ssub.s32 %s22, %s29
      %p31 = scmp.eq.s32.totalorder %s30, 0
      %s33 = sadd.s32 %s32, 1
      %s34 = scalar_select %p31, %s32, %s33
      %p37 = pneg %p31
      %p38 = scmp.eq.s32.totalorder %s22, 1
      %p39 = por %p37, %p38
      %p40 = scmp.ne.s32.totalorder %s32, %s35
      %p41 = scmp.eq.s32.totalorder %s22, 0
      %p42 = por %p40, %p41
      %p43 = scmp.ne.s32.totalorder %s32, %s35
      %p44 = scmp.eq.s32.totalorder %s27, 1
      %p45 = por %p43, %p44
      %p46 = scmp.ne.s32.totalorder %s35, %s36
      %p47 = scmp.eq.s32.totalorder %s27, 0
      %p48 = por %p46, %p47
      %p49 = scmp.ne.s32.totalorder %s35, %s36
      %p50 = scmp.eq.s32.totalorder %s28, 1
      %p51 = por %p49, %p50
      %p53 = scmp.ne.s32.totalorder %s36, %s52
      %p54 = scmp.eq.s32.totalorder %s28, 0
      %p55 = por %p53, %p54
      %s57 = sadd.s32 %s56, 1
      %p60 = scmp.eq.s32.totalorder %s22, 1
      %p61 = scmp.ne.s32.totalorder %s56, %s58
      %p62 = scmp.eq.s32.totalorder %s22, 0
      %p63 = por %p61, %p62
      %p64 = scmp.ne.s32.totalorder %s56, %s58
      %p65 = scmp.eq.s32.totalorder %s27, 1
      %p66 = por %p64, %p65
      %p67 = scmp.ne.s32.totalorder %s58, %s59
      %p68 = scmp.eq.s32.totalorder %s27, 0
      %p69 = por %p67, %p68
      %p70 = scmp.ne.s32.totalorder %s58, %s59
      %p71 = scmp.eq.s32.totalorder %s28, 1
      %p72 = por %p70, %p71
      %p74 = scmp.ne.s32.totalorder %s59, %s73
      %p75 = scmp.eq.s32.totalorder %s28, 0
      %p76 = por %p74, %p75
      %s78 = sadd.s32 %s77, 1
      %p81 = scmp.eq.s32.totalorder %s22, 1
      %p82 = scmp.ne.s32.totalorder %s77, %s79
      %p83 = scmp.eq.s32.totalorder %s22, 0
      %p84 = por %p82, %p83
      %p85 = scmp.ne.s32.totalorder %s77, %s79
      %p86 = scmp.eq.s32.totalorder %s27, 1
      %p87 = por %p85, %p86
      %p88 = scmp.ne.s32.totalorder %s79, %s80
      %p89 = scmp.eq.s32.totalorder %s27, 0
      %p90 = por %p88, %p89
      %p91 = scmp.ne.s32.totalorder %s79, %s80
      %p92 = scmp.eq.s32.totalorder %s28, 1
      %p93 = por %p91, %p92
      %p95 = scmp.ne.s32.totalorder %s80, %s94
      %p96 = scmp.eq.s32.totalorder %s28, 0
      %p97 = por %p95, %p96
      %s99 = sadd.s32 %s98, 1
      %p102 = scmp.eq.s32.totalorder %s22, 1
      %p103 = scmp.ne.s32.totalorder %s98, %s100
      %p104 = scmp.eq.s32.totalorder %s22, 0
      %p105 = por %p103, %p104
      %p106 = scmp.ne.s32.totalorder %s98, %s100
      %p107 = scmp.eq.s32.totalorder %s27, 1
      %p108 = por %p106, %p107
      %p109 = scmp.ne.s32.totalorder %s100, %s101
      %p110 = scmp.eq.s32.totalorder %s27, 0
      %p111 = por %p109, %p110
      %p112 = scmp.ne.s32.totalorder %s100, %s101
      %p113 = scmp.eq.s32.totalorder %s28, 1
      %p114 = por %p112, %p113
      %p116 = scmp.ne.s32.totalorder %s101, %s115
      %p117 = scmp.eq.s32.totalorder %s28, 0
      %p118 = por %p116, %p117
      %s120 = sadd.s32 %s119, 1
      %p123 = scmp.eq.s32.totalorder %s22, 1
      %p124 = scmp.ne.s32.totalorder %s119, %s121
      %p125 = scmp.eq.s32.totalorder %s22, 0
      %p126 = por %p124, %p125
      %p127 = scmp.ne.s32.totalorder %s119, %s121
      %p128 = scmp.eq.s32.totalorder %s27, 1
      %p129 = por %p127, %p128
      %p130 = scmp.ne.s32.totalorder %s121, %s122
      %p131 = scmp.eq.s32.totalorder %s27, 0
      %p132 = por %p130, %p131
      %p133 = scmp.ne.s32.totalorder %s121, %s122
      %p134 = scmp.eq.s32.totalorder %s28, 1
      %p135 = por %p133, %p134
      %p137 = scmp.ne.s32.totalorder %s122, %s136
      %p138 = scmp.eq.s32.totalorder %s28, 0
      %p139 = por %p137, %p138
      %s141 = sadd.s32 %s140, 1
      %p144 = scmp.eq.s32.totalorder %s22, 1
      %p145 = scmp.ne.s32.totalorder %s140, %s142
      %p146 = scmp.eq.s32.totalorder %s22, 0
      %p147 = por %p145, %p146
      %p148 = scmp.ne.s32.totalorder %s140, %s142
      %p149 = scmp.eq.s32.totalorder %s27, 1
      %p150 = por %p148, %p149
      %p151 = scmp.ne.s32.totalorder %s142, %s143
      %p152 = scmp.eq.s32.totalorder %s27, 0
      %p153 = por %p151, %p152
      %p154 = scmp.ne.s32.totalorder %s142, %s143
      %p155 = scmp.eq.s32.totalorder %s28, 1
      %p156 = por %p154, %p155
      %p158 = scmp.ne.s32.totalorder %s143, %s157
      %p159 = scmp.eq.s32.totalorder %s28, 0
      %p160 = por %p158, %p159
      %s162 = sadd.s32 %s161, 1
      %p165 = scmp.eq.s32.totalorder %s22, 1
      %p166 = scmp.ne.s32.totalorder %s161, %s163
      %p167 = scmp.eq.s32.totalorder %s22, 0
      %p168 = por %p166, %p167
      %p169 = scmp.ne.s32.totalorder %s161, %s163
      %p170 = scmp.eq.s32.totalorder %s27, 1
      %p171 = por %p169, %p170
      %p172 = scmp.ne.s32.totalorder %s163, %s164
      %p173 = scmp.eq.s32.totalorder %s27, 0
      %p174 = por %p172, %p173
      %p175 = scmp.ne.s32.totalorder %s163, %s164
      %p176 = scmp.eq.s32.totalorder %s28, 1
      %p177 = por %p175, %p176
      %p179 = scmp.ne.s32.totalorder %s164, %s178
      %p180 = scmp.eq.s32.totalorder %s28, 0
      %p181 = por %p179, %p180
      %s183 = sadd.s32 %s182, 1
      %p186 = scmp.eq.s32.totalorder %s22, 1
      %p187 = scmp.ne.s32.totalorder %s182, %s184
      %p188 = scmp.eq.s32.totalorder %s22, 0
      %p189 = por %p187, %p188
      %p190 = scmp.ne.s32.totalorder %s182, %s184
      %p191 = scmp.eq.s32.totalorder %s27, 1
      %p192 = por %p190, %p191
      %p193 = scmp.ne.s32.totalorder %s184, %s185
      %p194 = scmp.eq.s32.totalorder %s27, 0
      %p195 = por %p193, %p194
      %p196 = scmp.ne.s32.totalorder %s184, %s185
      %p197 = scmp.eq.s32.totalorder %s28, 1
      %p198 = por %p196, %p197
      %p200 = scmp.ne.s32.totalorder %s185, %s199
      %p201 = scmp.eq.s32.totalorder %s28, 0
      %p202 = por %p200, %p201
      %s204 = sadd.s32 %s203, 1
      %p207 = scmp.eq.s32.totalorder %s22, 1
      %p208 = scmp.ne.s32.totalorder %s203, %s205
      %p209 = scmp.eq.s32.totalorder %s22, 0
      %p210 = por %p208, %p209
      %p211 = scmp.ne.s32.totalorder %s203, %s205
      %p212 = scmp.eq.s32.totalorder %s27, 1
      %p213 = por %p211, %p212
      %p214 = scmp.ne.s32.totalorder %s205, %s206
      %p215 = scmp.eq.s32.totalorder %s27, 0
      %p216 = por %p214, %p215
      %p217 = scmp.ne.s32.totalorder %s205, %s206
      %p218 = scmp.eq.s32.totalorder %s28, 1
      %p219 = por %p217, %p218
      %p221 = scmp.ne.s32.totalorder %s206, %s220
      %p222 = scmp.eq.s32.totalorder %s28, 0
      %p223 = por %p221, %p222
      %s225 = sadd.s32 %s224, 1
      %p228 = scmp.eq.s32.totalorder %s22, 1
      %p229 = scmp.ne.s32.totalorder %s224, %s226
      %p230 = scmp.eq.s32.totalorder %s22, 0
      %p231 = por %p229, %p230
      %p232 = scmp.ne.s32.totalorder %s224, %s226
      %p233 = scmp.eq.s32.totalorder %s27, 1
      %p234 = por %p232, %p233
      %p235 = scmp.ne.s32.totalorder %s226, %s227
      %p236 = scmp.eq.s32.totalorder %s27, 0
      %p237 = por %p235, %p236
      %p238 = scmp.ne.s32.totalorder %s226, %s227
      %p239 = scmp.eq.s32.totalorder %s28, 1
      %p240 = por %p238, %p239
      %p242 = scmp.ne.s32.totalorder %s227, %s241
      %p243 = scmp.eq.s32.totalorder %s28, 0
      %p244 = por %p242, %p243
      %s246 = sadd.s32 %s245, 1
      %p249 = scmp.eq.s32.totalorder %s22, 1
      %p250 = scmp.ne.s32.totalorder %s245, %s247
      %p251 = scmp.eq.s32.totalorder %s22, 0
      %p252 = por %p250, %p251
      %p253 = scmp.ne.s32.totalorder %s245, %s247
      %p254 = scmp.eq.s32.totalorder %s27, 1
      %p255 = por %p253, %p254
      %p256 = scmp.ne.s32.totalorder %s247, %s248
      %p257 = scmp.eq.s32.totalorder %s27, 0
      %p258 = por %p256, %p257
      %p259 = scmp.ne.s32.totalorder %s247, %s248
      %p260 = scmp.eq.s32.totalorder %s28, 1
      %p261 = por %p259, %p260
      %p263 = scmp.ne.s32.totalorder %s248, %s262
      %p264 = scmp.eq.s32.totalorder %s28, 0
      %p265 = por %p263, %p264
      %s266 = ssub.s32 %s22, %s29
      %p267 = scmp.eq.s32.totalorder %s266, 0
      %s269 = sadd.s32 %s268, 1
      %s270 = scalar_select %p267, %s268, %s269
      %p273 = pneg %p267
      %p274 = scmp.eq.s32.totalorder %s22, 1
      %p275 = por %p273, %p274
      %p276 = scmp.ne.s32.totalorder %s268, %s271
      %p277 = scmp.eq.s32.totalorder %s22, 0
      %p278 = por %p276, %p277
      %p279 = scmp.ne.s32.totalorder %s268, %s271
      %p280 = scmp.eq.s32.totalorder %s27, 1
      %p281 = por %p279, %p280
      %p282 = scmp.ne.s32.totalorder %s271, %s272
      %p283 = scmp.eq.s32.totalorder %s27, 0
      %p284 = por %p282, %p283
      %p285 = scmp.ne.s32.totalorder %s271, %s272
      %p286 = scmp.eq.s32.totalorder %s28, 1
      %p287 = por %p285, %p286
      %p289 = scmp.ne.s32.totalorder %s272, %s288
      %p290 = scmp.eq.s32.totalorder %s28, 0
      %p291 = por %p289, %p290
      %p292 = scmp.le.s32.totalorder 1, %s22
      %p293 = scmp.lt.s32.totalorder %s22, 3
      %p294 = pnand %p292, %p293
      %p295 = pneg %p294
      // Predicated region
      $region9: #{tpu_custom_call.1} parent=5 // pred_check
        _
      $region10: #{tpu_custom_call.1} parent=5 // pred_check_branch
        %297 = sbr.rel (%p294) target = $region12
      $region11: #{tpu_custom_call.1} parent=5 // pred_region
        %s298 = ssub.s32 %s22, 1
        // Predicated region
        $region13: #{tpu_custom_call.1} parent=11 // pred_check
          %p299 = pneg %p69
        $region14: #{tpu_custom_call.1} parent=11 // pred_check_branch
          %301 = sbr.rel (%p299) target = $region16
        $region15: #{tpu_custom_call.1} parent=11 // pred_region
          _
        $region16: #{tpu_custom_call.1} parent=11 // pred_fallthru
          _
        // Predicated region
        $region17: #{tpu_custom_call.1} parent=11 // pred_check
          %p302 = pneg %p90
        $region18: #{tpu_custom_call.1} parent=11 // pred_check_branch
          %304 = sbr.rel (%p302) target = $region20
        $region19: #{tpu_custom_call.1} parent=11 // pred_region
          _
        $region20: #{tpu_custom_call.1} parent=11 // pred_fallthru
          _
        // Predicated region
        $region21: #{tpu_custom_call.1} parent=11 // pred_check
          %p305 = pneg %p111
        $region22: #{tpu_custom_call.1} parent=11 // pred_check_branch
          %307 = sbr.rel (%p305) target = $region24
        $region23: #{tpu_custom_call.1} parent=11 // pred_region
          _
        $region24: #{tpu_custom_call.1} parent=11 // pred_fallthru
          _
        // Predicated region
        $region25: #{tpu_custom_call.1} parent=11 // pred_check
          %p308 = pneg %p132
        $region26: #{tpu_custom_call.1} parent=11 // pred_check_branch
          %310 = sbr.rel (%p308) target = $region28
        $region27: #{tpu_custom_call.1} parent=11 // pred_region
          _
        $region28: #{tpu_custom_call.1} parent=11 // pred_fallthru
          _
        // Predicated region
        $region29: #{tpu_custom_call.1} parent=11 // pred_check
          %p311 = pneg %p153
        $region30: #{tpu_custom_call.1} parent=11 // pred_check_branch
          %313 = sbr.rel (%p311) target = $region32
        $region31: #{tpu_custom_call.1} parent=11 // pred_region
          _
        $region32: #{tpu_custom_call.1} parent=11 // pred_fallthru
          _
        // Predicated region
        $region33: #{tpu_custom_call.1} parent=11 // pred_check
          %p314 = pneg %p174
        $region34: #{tpu_custom_call.1} parent=11 // pred_check_branch
          %316 = sbr.rel (%p314) target = $region36
        $region35: #{tpu_custom_call.1} parent=11 // pred_region
          _
        $region36: #{tpu_custom_call.1} parent=11 // pred_fallthru
          _
        // Predicated region
        $region37: #{tpu_custom_call.1} parent=11 // pred_check
          %p317 = pneg %p195
        $region38: #{tpu_custom_call.1} parent=11 // pred_check_branch
          %319 = sbr.rel (%p317) target = $region40
        $region39: #{tpu_custom_call.1} parent=11 // pred_region
          _
        $region40: #{tpu_custom_call.1} parent=11 // pred_fallthru
          _
        // Predicated region
        $region41: #{tpu_custom_call.1} parent=11 // pred_check
          %p320 = pneg %p216
        $region42: #{tpu_custom_call.1} parent=11 // pred_check_branch
          %322 = sbr.rel (%p320) target = $region44
        $region43: #{tpu_custom_call.1} parent=11 // pred_region
          _
        $region44: #{tpu_custom_call.1} parent=11 // pred_fallthru
          _
        // Predicated region
        $region45: #{tpu_custom_call.1} parent=11 // pred_check
          %p323 = pneg %p237
        $region46: #{tpu_custom_call.1} parent=11 // pred_check_branch
          %325 = sbr.rel (%p323) target = $region48
        $region47: #{tpu_custom_call.1} parent=11 // pred_region
          _
        $region48: #{tpu_custom_call.1} parent=11 // pred_fallthru
          _
        // Predicated region
        $region49: #{tpu_custom_call.1} parent=11 // pred_check
          %p326 = pneg %p258
        $region50: #{tpu_custom_call.1} parent=11 // pred_check_branch
          %328 = sbr.rel (%p326) target = $region52
        $region51: #{tpu_custom_call.1} parent=11 // pred_region
          _
        $region52: #{tpu_custom_call.1} parent=11 // pred_fallthru
          _
      $region12: #{tpu_custom_call.1} parent=5 // pred_fallthru
        _
      %p329 = scmp.lt.s32.totalorder %s22, 2
      // Predicated region
      $region53: #{tpu_custom_call.1} parent=5 // pred_check
        %p330 = pneg %p329
      $region54: #{tpu_custom_call.1} parent=5 // pred_check_branch
        %332 = sbr.rel (%p330) target = $region56
      $region55: #{tpu_custom_call.1} parent=5 // pred_region
        // Predicated region
        $region57: #{tpu_custom_call.1} parent=55 // pred_check
          %p333 = pneg %p42
        $region58: #{tpu_custom_call.1} parent=55 // pred_check_branch
          %335 = sbr.rel (%p333) target = $region60
        $region59: #{tpu_custom_call.1} parent=55 // pred_region
          %p336 = scmp.lt.s32.totalorder %s22, 1
          %s337 = scalar_select %p336, %s22, 1
          %s338 = smul.addr %s337, 8
          %s339 = scalar_lea.vmem %s0, %s338
        $region60: #{tpu_custom_call.1} parent=55 // pred_fallthru
          _
      $region56: #{tpu_custom_call.1} parent=5 // pred_fallthru
        _
      %p340 = scmp.le.s32.totalorder 1, %s22
      %p341 = scmp.lt.s32.totalorder %s22, 3
      %p342 = pnand %p340, %p341
      %p343 = pneg %p342
      // Predicated region
      $region61: #{tpu_custom_call.1} parent=5 // pred_check
        _
      $region62: #{tpu_custom_call.1} parent=5 // pred_check_branch
        %345 = sbr.rel (%p342) target = $region64
      $region63: #{tpu_custom_call.1} parent=5 // pred_region
        %s346 = ssub.s32 %s22, 1
        %p347 = scmp.lt.s32.totalorder %s27, 1
        %s348 = scalar_select %p347, %s27, 1
        %s349 = smul.addr %s348, 8
        %s350 = scalar_lea.vmem %s0, %s349
        %p351 = pneg %p48
        %p352 = pneg %p45
        %p353 = pneg %p69
        %p354 = pneg %p66
        %p355 = pneg %p90
        %p356 = pneg %p87
        %p357 = pneg %p111
        %p358 = pneg %p108
        %p359 = pneg %p132
        %p360 = pneg %p129
        %p361 = pneg %p153
        %p362 = pneg %p150
        %p363 = pneg %p174
        %p364 = pneg %p171
        %p365 = pneg %p195
        %p366 = pneg %p192
        %p367 = pneg %p216
        %p368 = pneg %p213
        %p369 = pneg %p237
        %p370 = pneg %p234
        %p371 = pneg %p258
        %p372 = pneg %p255
        %p373 = pneg %p284
        %p374 = pneg %p281
        %s375 = sand.u32 %s271, 1
        %s376 = scalar_lea.sflag [#allocation4], %s375
        %s377 = sand.u32 %s271, 1
        %s378 = scalar_lea.vmem [#allocation3], %s377
        %p379 = scmp.lt.s32.totalorder %s27, 1
        %s380 = scalar_select %p379, %s27, 1
        %s381 = smul.addr %s380, 8
        %s382 = scalar_lea.vmem %s0, %s381
        %v383 = vld [vmem:[%s382] sm:$0xff]
        %v384 = vld [vmem:[%s1] sm:$0xff]
        %v385 = vld [vmem:[%s1 + $0x8] sm:$0xff]
        %v386 = vld [vmem:[%s1 + $0x10] sm:$0xff]
        %v387 = vld [vmem:[%s1 + $0x18] sm:$0xff]
        %v388 = vld [vmem:[%s2] sm:$0xff]
        %v389 = vld [vmem:[%s2 + $0x8] sm:$0xff]
        %v390 = vld [vmem:[%s2 + $0x10] sm:$0xff]
        %v391 = vld [vmem:[%s2 + $0x18] sm:$0xff]
        %393 = vset.pattern.permute.xlu0 0
        %394 = vperm.xlu0 %393, %v388
        %v395 = vpop.permute.xlu0 %394
        %398 = vset.pattern.permute.xlu0 0
        %399 = vperm.xlu0 %398, %v389
        %v400 = vpop.permute.xlu0 %399
        %403 = vset.pattern.permute.xlu0 0
        %404 = vperm.xlu0 %403, %v390
        %v405 = vpop.permute.xlu0 %404
        %408 = vset.pattern.permute.xlu0 0
        %409 = vperm.xlu0 %408, %v391
        %v410 = vpop.permute.xlu0 %409
        %vm412 = vcmask 64512
        %v414 = vsel %vm412, %v384, 0
        %v417 = vsel %vm412, %v385, 0
        %v420 = vsel %vm412, %v386, 0
        %v423 = vsel %vm412, %v387, 0
        %425 = vmatpush.msra.mxu0 0.0
        %426 = vmatpush.msra.mxu0 0.0
        %427 = vmatpush.msra.mxu0 0.0
        %428 = vmatpush.msra.mxu0 0.0
        %429 = vmatpush.msra.mxu0 0.0
        %430 = vmatpush.msra.mxu0 0.0
        %431 = vmatpush.msra.mxu0 0.0
        %432 = vmatpush.msra.mxu0 0.0
        %433 = vmatpush.msra.mxu0 0.0
        %434 = vmatpush.msra.mxu0 0.0
        %435 = vmatpush.msra.mxu0 0.0
        %436 = vmatpush.msra.mxu0 0.0
        %437 = vmatpush.msra.mxu0 0.0
        %438 = vmatpush.msra.mxu0 0.0
        %439 = vmatpush.msra.mxu0 0.0
        %440 = vmatpush.msra.mxu0 %v383
        %441 = vmatmul.f32.gmra.mxu0 %v414
        %v442 = vpop.f32.mrf.mxu0
        %v443 = vadd.f32 %v395, %v442
        %444 = vmatmul.f32.gmra.mxu0 %v417
        %v445 = vpop.f32.mrf.mxu0
        %v446 = vadd.f32 %v400, %v445
        %447 = vmatmul.f32.gmra.mxu0 %v420
        %v448 = vpop.f32.mrf.mxu0
        %v449 = vadd.f32 %v405, %v448
        %450 = vmatmul.f32.gmra.mxu0 %v423
        %v451 = vpop.f32.mrf.mxu0
        %v452 = vadd.f32 %v410, %v451
        %453 = vdwg.mxu0
        %vm454 = vcmp.gt.f32.partialorder %v443, 0.0
        %vm455 = vcmp.gt.f32.partialorder %v446, 0.0
        %vm456 = vcmp.gt.f32.partialorder %v449, 0.0
        %vm457 = vcmp.gt.f32.partialorder %v452, 0.0
        %v458 = vmul.f32 %v443, 0.01
        %v459 = vmul.f32 %v446, 0.01
        %v460 = vmul.f32 %v449, 0.01
        %v461 = vmul.f32 %v452, 0.01
        %v462 = vsel %vm454, %v443, %v458
        %v463 = vsel %vm455, %v446, %v459
        %v464 = vsel %vm456, %v449, %v460
        %v465 = vsel %vm457, %v452, %v461
        %v466 = vld [vmem:[%s3] sm:$0xff]
        %v467 = vld [vmem:[%s3 + $0x8] sm:$0xff]
        %v468 = vld [vmem:[%s3 + $0x10] sm:$0xff]
        %v469 = vld [vmem:[%s3 + $0x18] sm:$0xff]
        %v470 = vld [vmem:[%s3 + $0x20] sm:$0xff]
        %v471 = vld [vmem:[%s3 + $0x28] sm:$0xff]
        %v472 = vld [vmem:[%s3 + $0x30] sm:$0xff]
        %v473 = vld [vmem:[%s3 + $0x38] sm:$0xff]
        %v474 = vld [vmem:[%s4] sm:$0xff]
        %v475 = vld [vmem:[%s4 + $0x8] sm:$0xff]
        %v476 = vld [vmem:[%s4 + $0x10] sm:$0xff]
        %v477 = vld [vmem:[%s4 + $0x18] sm:$0xff]
        %v478 = vld [vmem:[%s4 + $0x20] sm:$0xff]
        %v479 = vld [vmem:[%s4 + $0x28] sm:$0xff]
        %v480 = vld [vmem:[%s4 + $0x30] sm:$0xff]
        %v481 = vld [vmem:[%s4 + $0x38] sm:$0xff]
        %483 = vset.pattern.permute.xlu0 0
        %484 = vperm.xlu0 %483, %v474
        %v485 = vpop.permute.xlu0 %484
        %488 = vset.pattern.permute.xlu0 0
        %489 = vperm.xlu0 %488, %v475
        %v490 = vpop.permute.xlu0 %489
        %493 = vset.pattern.permute.xlu0 0
        %494 = vperm.xlu0 %493, %v476
        %v495 = vpop.permute.xlu0 %494
        %498 = vset.pattern.permute.xlu0 0
        %499 = vperm.xlu0 %498, %v477
        %v500 = vpop.permute.xlu0 %499
        %503 = vset.pattern.permute.xlu0 0
        %504 = vperm.xlu0 %503, %v478
        %v505 = vpop.permute.xlu0 %504
        %508 = vset.pattern.permute.xlu0 0
        %509 = vperm.xlu0 %508, %v479
        %v510 = vpop.permute.xlu0 %509
        %513 = vset.pattern.permute.xlu0 0
        %514 = vperm.xlu0 %513, %v480
        %v515 = vpop.permute.xlu0 %514
        %518 = vset.pattern.permute.xlu0 0
        %519 = vperm.xlu0 %518, %v481
        %v520 = vpop.permute.xlu0 %519
        %vm522 = vcmask 261120
        %v524 = vsel %vm522, %v466, 0
        %v527 = vsel %vm522, %v467, 0
        %v530 = vsel %vm522, %v468, 0
        %v533 = vsel %vm522, %v469, 0
        %v536 = vsel %vm522, %v470, 0
        %v539 = vsel %vm522, %v471, 0
        %v542 = vsel %vm522, %v472, 0
        %v545 = vsel %vm522, %v473, 0
        %547 = vmatpush.msra.mxu0 0.0
        %548 = vmatpush.msra.mxu0 0.0
        %549 = vmatpush.msra.mxu0 0.0
        %550 = vmatpush.msra.mxu0 0.0
        %551 = vmatpush.msra.mxu0 0.0
        %552 = vmatpush.msra.mxu0 0.0
        %553 = vmatpush.msra.mxu0 0.0
        %554 = vmatpush.msra.mxu0 0.0
        %555 = vmatpush.msra.mxu0 0.0
        %556 = vmatpush.msra.mxu0 0.0
        %557 = vmatpush.msra.mxu0 0.0
        %558 = vmatpush.msra.mxu0 0.0
        %559 = vmatpush.msra.mxu0 %v465
        %560 = vmatpush.msra.mxu0 %v464
        %561 = vmatpush.msra.mxu0 %v463
        %562 = vmatpush.msra.mxu0 %v462
        %563 = vmatmul.f32.gmra.mxu0 %v524
        %v564 = vpop.f32.mrf.mxu0
        %v565 = vadd.f32 %v485, %v564
        %566 = vmatmul.f32.gmra.mxu0 %v527
        %v567 = vpop.f32.mrf.mxu0
        %v568 = vadd.f32 %v490, %v567
        %569 = vmatmul.f32.gmra.mxu0 %v530
        %v570 = vpop.f32.mrf.mxu0
        %v571 = vadd.f32 %v495, %v570
        %572 = vmatmul.f32.gmra.mxu0 %v533
        %v573 = vpop.f32.mrf.mxu0
        %v574 = vadd.f32 %v500, %v573
        %575 = vmatmul.f32.gmra.mxu0 %v536
        %v576 = vpop.f32.mrf.mxu0
        %v577 = vadd.f32 %v505, %v576
        %578 = vmatmul.f32.gmra.mxu0 %v539
        %v579 = vpop.f32.mrf.mxu0
        %v580 = vadd.f32 %v510, %v579
        %581 = vmatmul.f32.gmra.mxu0 %v542
        %v582 = vpop.f32.mrf.mxu0
        %v583 = vadd.f32 %v515, %v582
        %584 = vmatmul.f32.gmra.mxu0 %v545
        %v585 = vpop.f32.mrf.mxu0
        %v586 = vadd.f32 %v520, %v585
        %587 = vdwg.mxu0
        %vm588 = vcmp.gt.f32.partialorder %v565, 0.0
        %vm589 = vcmp.gt.f32.partialorder %v568, 0.0
        %vm590 = vcmp.gt.f32.partialorder %v571, 0.0
        %vm591 = vcmp.gt.f32.partialorder %v574, 0.0
        %vm592 = vcmp.gt.f32.partialorder %v577, 0.0
        %vm593 = vcmp.gt.f32.partialorder %v580, 0.0
        %vm594 = vcmp.gt.f32.partialorder %v583, 0.0
        %vm595 = vcmp.gt.f32.partialorder %v586, 0.0
        %v596 = vmul.f32 %v565, 0.01
        %v597 = vmul.f32 %v568, 0.01
        %v598 = vmul.f32 %v571, 0.01
        %v599 = vmul.f32 %v574, 0.01
        %v600 = vmul.f32 %v577, 0.01
        %v601 = vmul.f32 %v580, 0.01
        %v602 = vmul.f32 %v583, 0.01
        %v603 = vmul.f32 %v586, 0.01
        %v604 = vsel %vm588, %v565, %v596
        %v605 = vsel %vm589, %v568, %v597
        %v606 = vsel %vm590, %v571, %v598
        %v607 = vsel %vm591, %v574, %v599
        %v608 = vsel %vm592, %v577, %v600
        %v609 = vsel %vm593, %v580, %v601
        %v610 = vsel %vm594, %v583, %v602
        %v611 = vsel %vm595, %v586, %v603
        %v612 = vld [vmem:[%s5] sm:$0xff]
        %v613 = vld [vmem:[%s5 + $0x8] sm:$0xff]
        %v614 = vld [vmem:[%s5 + $0x10] sm:$0xff]
        %v615 = vld [vmem:[%s5 + $0x18] sm:$0xff]
        %v616 = vld [vmem:[%s6] sm:$0xff]
        %v617 = vld [vmem:[%s6 + $0x8] sm:$0xff]
        %v618 = vld [vmem:[%s6 + $0x10] sm:$0xff]
        %v619 = vld [vmem:[%s6 + $0x18] sm:$0xff]
        %621 = vset.pattern.permute.xlu0 0
        %622 = vperm.xlu0 %621, %v616
        %v623 = vpop.permute.xlu0 %622
        %626 = vset.pattern.permute.xlu0 0
        %627 = vperm.xlu0 %626, %v617
        %v628 = vpop.permute.xlu0 %627
        %631 = vset.pattern.permute.xlu0 0
        %632 = vperm.xlu0 %631, %v618
        %v633 = vpop.permute.xlu0 %632
        %636 = vset.pattern.permute.xlu0 0
        %637 = vperm.xlu0 %636, %v619
        %v638 = vpop.permute.xlu0 %637
        %vm640 = vcmask 523264
        %v642 = vsel %vm640, %v612, 0
        %v645 = vsel %vm640, %v613, 0
        %v648 = vsel %vm640, %v614, 0
        %v651 = vsel %vm640, %v615, 0
        %653 = vmatpush.msra.mxu0 0.0
        %654 = vmatpush.msra.mxu0 0.0
        %655 = vmatpush.msra.mxu0 0.0
        %656 = vmatpush.msra.mxu0 0.0
        %657 = vmatpush.msra.mxu0 0.0
        %658 = vmatpush.msra.mxu0 0.0
        %659 = vmatpush.msra.mxu0 0.0
        %660 = vmatpush.msra.mxu0 0.0
        %661 = vmatpush.msra.mxu0 %v611
        %662 = vmatpush.msra.mxu0 %v610
        %663 = vmatpush.msra.mxu0 %v609
        %664 = vmatpush.msra.mxu0 %v608
        %665 = vmatpush.msra.mxu0 %v607
        %666 = vmatpush.msra.mxu0 %v606
        %667 = vmatpush.msra.mxu0 %v605
        %668 = vmatpush.msra.mxu0 %v604
        %669 = vmatmul.f32.gmra.mxu0 %v642
        %v670 = vpop.f32.mrf.mxu0
        %v671 = vadd.f32 %v623, %v670
        %672 = vmatmul.f32.gmra.mxu0 %v645
        %v673 = vpop.f32.mrf.mxu0
        %v674 = vadd.f32 %v628, %v673
        %675 = vmatmul.f32.gmra.mxu0 %v648
        %v676 = vpop.f32.mrf.mxu0
        %v677 = vadd.f32 %v633, %v676
        %678 = vmatmul.f32.gmra.mxu0 %v651
        %v679 = vpop.f32.mrf.mxu0
        %v680 = vadd.f32 %v638, %v679
        %681 = vdwg.mxu0
        %vm682 = vcmp.gt.f32.partialorder %v671, 0.0
        %vm683 = vcmp.gt.f32.partialorder %v674, 0.0
        %vm684 = vcmp.gt.f32.partialorder %v677, 0.0
        %vm685 = vcmp.gt.f32.partialorder %v680, 0.0
        %v686 = vmul.f32 %v671, 0.01
        %v687 = vmul.f32 %v674, 0.01
        %v688 = vmul.f32 %v677, 0.01
        %v689 = vmul.f32 %v680, 0.01
        %v690 = vsel %vm682, %v671, %v686
        %v691 = vsel %vm683, %v674, %v687
        %v692 = vsel %vm684, %v677, %v688
        %v693 = vsel %vm685, %v680, %v689
        %v694 = vld [vmem:[%s7] sm:$0xff]
        %v695 = vld [vmem:[%s7 + $0x8] sm:$0xff]
        %v696 = vld [vmem:[%s8] sm:$0xff]
        %v697 = vld [vmem:[%s8 + $0x8] sm:$0xff]
        %699 = vset.pattern.permute.xlu0 0
        %700 = vperm.xlu0 %699, %v696
        %v701 = vpop.permute.xlu0 %700
        %704 = vset.pattern.permute.xlu0 0
        %705 = vperm.xlu0 %704, %v697
        %v706 = vpop.permute.xlu0 %705
        %v709 = vsel %vm522, %v694, 0
        %v712 = vsel %vm522, %v695, 0
        %714 = vmatpush.msra.mxu0 0.0
        %715 = vmatpush.msra.mxu0 0.0
        %716 = vmatpush.msra.mxu0 0.0
        %717 = vmatpush.msra.mxu0 0.0
        %718 = vmatpush.msra.mxu0 0.0
        %719 = vmatpush.msra.mxu0 0.0
        %720 = vmatpush.msra.mxu0 0.0
        %721 = vmatpush.msra.mxu0 0.0
        %722 = vmatpush.msra.mxu0 0.0
        %723 = vmatpush.msra.mxu0 0.0
        %724 = vmatpush.msra.mxu0 0.0
        %725 = vmatpush.msra.mxu0 0.0
        %726 = vmatpush.msra.mxu0 %v693
        %727 = vmatpush.msra.mxu0 %v692
        %728 = vmatpush.msra.mxu0 %v691
        %729 = vmatpush.msra.mxu0 %v690
        %730 = vmatmul.f32.gmra.mxu0 %v709
        %v731 = vpop.f32.mrf.mxu0
        %v732 = vadd.f32 %v701, %v731
        %733 = vmatmul.f32.gmra.mxu0 %v712
        %v734 = vpop.f32.mrf.mxu0
        %v735 = vadd.f32 %v706, %v734
        %736 = vdwg.mxu0
        %vm737 = vcmp.gt.f32.partialorder %v732, 0.0
        %vm738 = vcmp.gt.f32.partialorder %v735, 0.0
        %v739 = vmul.f32 %v732, 0.01
        %v740 = vmul.f32 %v735, 0.01
        %v741 = vsel %vm737, %v732, %v739
        %v742 = vsel %vm738, %v735, %v740
        %v743 = vld [vmem:[%s9] sm:$0x1]
        %v744 = vld [vmem:[#allocation2] sm:$0x1]
        %746 = vset.pattern.permute.xlu0 0
        %747 = vperm.xlu0 %746, %v744
        %v748 = vpop.permute.xlu0 %747
        %v750 = vperm.slane %v748, 0
        %vm751 = vcmask 130048
        %v753 = vsel %vm751, %v743, 0
        %755 = vmatpush.msra.mxu0 0.0
        %756 = vmatpush.msra.mxu0 0.0
        %757 = vmatpush.msra.mxu0 0.0
        %758 = vmatpush.msra.mxu0 0.0
        %759 = vmatpush.msra.mxu0 0.0
        %760 = vmatpush.msra.mxu0 0.0
        %761 = vmatpush.msra.mxu0 0.0
        %762 = vmatpush.msra.mxu0 0.0
        %763 = vmatpush.msra.mxu0 0.0
        %764 = vmatpush.msra.mxu0 0.0
        %765 = vmatpush.msra.mxu0 0.0
        %766 = vmatpush.msra.mxu0 0.0
        %767 = vmatpush.msra.mxu0 0.0
        %768 = vmatpush.msra.mxu0 0.0
        %769 = vmatpush.msra.mxu0 %v742
        %770 = vmatpush.msra.mxu0 %v741
        %771 = vmatmul.f32.gmra.mxu0 %v753
        %v772 = vpop.f32.mrf.mxu0
        %v773 = vadd.f32 %v750, %v772
        %774 = vdwg.mxu0
        %775 = vst [vmem:[%s378] sm:$0x1] %v773
        %s776 = sand.u32 %s271, 1
        %s777 = scalar_lea.sflag [#allocation4], %s776
        %s778 = sand.u32 %s271, 1
        %s779 = scalar_lea.vmem [#allocation3], %s778
        // Predicated region
        $region65: #{tpu_custom_call.1} parent=63 // pred_check
          %p780 = pneg %p281
        $region66: #{tpu_custom_call.1} parent=63 // pred_check_branch
          %782 = sbr.rel (%p780) target = $region68
        $region67: #{tpu_custom_call.1} parent=63 // pred_region
          %784 = vsyncadd %s777, 0
          %s785 = scalar_lea.hbm %s11, %s27
          %s787 = sshll.u32 %s779, 4
          %s788 = int_to_ptr.vmem [resolvable:$true] %s787
          %s789 = sshll.u32 %s785, 4
          %s790 = int_to_ptr.hbm [resolvable:$true] %s789
          %792 = dma.vmem_to_hbm [thread:$0]  %s788, 16, %s790, %s777
        $region68: #{tpu_custom_call.1} parent=63 // pred_fallthru
          _
      $region64: #{tpu_custom_call.1} parent=5 // pred_fallthru
        _
      %p793 = scmp.le.s32.totalorder 2, %s22
      // Predicated region
      $region69: #{tpu_custom_call.1} parent=5 // pred_check
        %p794 = pneg %p793
      $region70: #{tpu_custom_call.1} parent=5 // pred_check_branch
        %796 = sbr.rel (%p794) target = $region72
      $region71: #{tpu_custom_call.1} parent=5 // pred_region
        %s797 = ssub.s32 %s22, 2
        // Predicated region
        $region73: #{tpu_custom_call.1} parent=71 // pred_check
          %p798 = pneg %p287
        $region74: #{tpu_custom_call.1} parent=71 // pred_check_branch
          %800 = sbr.rel (%p798) target = $region76
        $region75: #{tpu_custom_call.1} parent=71 // pred_region
          %s801 = sand.u32 %s272, 1
          %s802 = scalar_lea.sflag [#allocation4], %s801
          %s803 = sand.u32 %s272, 1
          %s804 = scalar_lea.vmem [#allocation3], %s803
          %806 = dma.done %s802, 16
        $region76: #{tpu_custom_call.1} parent=71 // pred_fallthru
          _
      $region72: #{tpu_custom_call.1} parent=5 // pred_fallthru
        _
    $region6: #{tpu_custom_call.1} parent=1 // loop_footer
      %s26 = sadd.s32 1, %s22
    $region7: #{tpu_custom_call.1} parent=1 // loop_footer_branch
      %21 = sbr.rel target = $region3
    $region8: #{tpu_custom_call.1} parent=1 // loop_exit
      _
    %807 = vsyncpa [#allocation4], 1
    %s808 = scalar_lea.sflag [#allocation4], 1
    %809 = vsyncpa %s808, 1

</llo_original>
